<compile_context>
chip_gen: v5e
topology: v5e:2x2
jax: 0.10.0
libtpu: 0.0.40
codegen_flags: <defaults>
</compile_context>

<pallas_src>
import math

import jax
import jax.numpy as jnp
from jax import lax
from jax.experimental import pallas as pl
from jax.experimental.pallas import tpu as pltpu


def _round_up(x, m):
    return ((x + m - 1) // m) * m


# ----------------------------------------------------------------------------
# Kernels
# ----------------------------------------------------------------------------
def _stgp_flat_kernel(x_ref, beta_ref, ksi_ref, o_ref):
    """Single K step (V_pad == tk): out = relu(X @ beta.T + ksi). grid=(nh,)."""
    z = lax.dot_general(
        x_ref[...], beta_ref[...],
        dimension_numbers=(((1,), (1,)), ((), ())),   # contract V of X with V of beta == X @ beta.T
        preferred_element_type=jnp.float32)
    o_ref[...] = jnp.maximum(z + ksi_ref[...], 0.0)


def _make_multik_kernel(tk, x_resident):
    """grid = (H tiles, K tiles); accumulate straight into the resident f32 o_ref."""

    def kernel(x_ref, beta_ref, ksi_ref, o_ref):
        k = pl.program_id(1)

        @pl.when(k == 0)
        def _():
            o_ref[...] = jnp.zeros_like(o_ref)

        if x_resident:
            # X lives fully in VMEM; slice the current K chunk in-place.
            off = pl.multiple_of(k * tk, 128)
            x_blk = x_ref[:, pl.ds(off, tk)]
        else:
            x_blk = x_ref[...]

        o_ref[...] += lax.dot_general(
            x_blk, beta_ref[...],
            dimension_numbers=(((1,), (1,)), ((), ())),
            preferred_element_type=jnp.float32)

        @pl.when(k == pl.num_programs(1) - 1)
        def _():
            o_ref[...] = jnp.maximum(o_ref[...] + ksi_ref[...], 0.0)

    return kernel


# ----------------------------------------------------------------------------
# One-time parameter preparation (pad + bf16 cast, hoisted out of forward)
# ----------------------------------------------------------------------------
def prepare_params(beta, ksi, *, th=512, tk=4096, compute_dtype=jnp.bfloat16):
    """Pad beta/ksi to lane-dense shapes and cast beta to the MXU dtype ONCE."""
    beta = jnp.asarray(beta)
    H, V = beta.shape

    # --- H tile: multiple of 128, <= th, dividing H_pad; prefer >=2 blocks so
    # the "parallel" H axis actually shards across v7x's two TensorCores.
    H_pad = _round_up(H, 128)
    if H_pad <= 128:
        th_sel = H_pad
    else:
        th_sel = 128
        for cand in range(128, min(th, H_pad // 2) + 1, 128):
            if H_pad % cand == 0:
                th_sel = cand
    th = th_sel

    # --- K tile: multiple of 128 dividing V_pad, as large as possible (<= tk);
    # if only tiny divisors exist, pad V up to a multiple of tk instead.
    V_pad = _round_up(V, 128)
    if V_pad <= tk:
        tk = V_pad
    else:
        best = 128
        for cand in range(tk, 127, -128):
            if V_pad % cand == 0:
                best = cand
                break
        if best >= 1024:
            tk = best
        else:
            V_pad = _round_up(V_pad, tk)

    beta_p = jnp.zeros((H_pad, V_pad), compute_dtype)
    beta_p = beta_p.at[:H, :V].set(beta.astype(compute_dtype))
    ksi_p = jnp.zeros((1, H_pad), jnp.float32)
    ksi_p = ksi_p.at[0, :H].set(jnp.asarray(ksi, jnp.float32))

    meta = dict(H=H, V=V, H_pad=H_pad, V_pad=V_pad, th=th, tk=tk,
                compute_dtype=compute_dtype)
    return beta_p, ksi_p, meta


# ----------------------------------------------------------------------------
# Forward wrapper
# ----------------------------------------------------------------------------
_X_RESIDENT_MAX_BYTES = 8 * 1024 * 1024   # keep full X in VMEM when this small


def stgp_input_forward(x, beta_p, ksi_p, meta):
    """relu(x @ beta.T + ksi) with a tiled, pipelined Pallas kernel."""
    B, V = x.shape
    H = meta["H"]
    assert V == meta["V"], "x feature dim must match beta's V"
    H_pad, V_pad = meta["H_pad"], meta["V_pad"]
    th, tk = meta["th"], meta["tk"]
    cdt = meta["compute_dtype"]
    itemsize = jnp.dtype(cdt).itemsize

    # Pad batch to a multiple of 16 (full bf16 sublane packing).  Skip padding
    # entirely when the input is already aligned (no extra HBM round trip).
    B_pad = _round_up(max(B, 16), 16)
    x_c = jnp.asarray(x).astype(cdt)
    if B_pad == B and V_pad == V:
        x_p = x_c
    else:
        x_p = jnp.pad(x_c, ((0, B_pad - B), (0, V_pad - V)))

    nh = H_pad // th
    nk = V_pad // tk
    x_bytes = B_pad * V_pad * itemsize
    x_resident = x_bytes <= _X_RESIDENT_MAX_BYTES

    if nk == 1:
        # Flat kernel: no reduction bookkeeping at all.
        grid = (nh,)
        in_specs = [
            pl.BlockSpec((B_pad, V_pad), lambda h: (0, 0)),     # X (whole array)
            pl.BlockSpec((th, V_pad),    lambda h: (h, 0)),     # beta (H, V) layout
            pl.BlockSpec((1, th),        lambda h: (0, h)),     # ksi
        ]
        out_specs = pl.BlockSpec((B_pad, th), lambda h: (0, h))
        kernel = _stgp_flat_kernel
        dims = ("parallel",)
        x_stream_bytes = x_bytes                                # X read once
        x_vmem = 2 * x_bytes
    else:
        grid = (nh, nk)
        if x_resident:
            x_spec = pl.BlockSpec((B_pad, V_pad), lambda h, k: (0, 0))
            x_stream_bytes = x_bytes                            # DMA'd once
            x_vmem = 2 * x_bytes
        else:
            x_spec = pl.BlockSpec((B_pad, tk), lambda h, k: (0, k))
            x_stream_bytes = x_bytes * nh                       # re-streamed per H tile
            x_vmem = 2 * B_pad * tk * itemsize
        in_specs = [
            x_spec,
            pl.BlockSpec((th, tk), lambda h, k: (h, k)),        # beta (H, V) layout
            pl.BlockSpec((1, th),  lambda h, k: (0, h)),        # ksi
        ]
        out_specs = pl.BlockSpec((B_pad, th), lambda h, k: (0, h))
        kernel = _make_multik_kernel(tk, x_resident)
        dims = ("parallel", "arbitrary")

    # Tight VMEM estimate: double-buffered inputs + resident f32 output tile.
    vmem_bytes = (x_vmem
                  + 2 * th * tk * itemsize          # beta (double-buffered)
                  + 2 * th * 4                      # ksi
                  + 2 * B_pad * th * 4)             # output tile
    # 40 MiB cap keeps headroom on v7x's 64 MiB VMEM (and is plenty on v5e/v6e).
    vmem_limit = int(min(max(int(vmem_bytes * 1.25), 4 * 1024 * 1024),
                         40 * 1024 * 1024))

    bytes_accessed = (H_pad * V_pad * itemsize      # beta, streamed once
                      + x_stream_bytes              # X (actual traffic)
                      + H_pad * 4                   # ksi
                      + B_pad * H_pad * 4)          # output
    cost = pl.CostEstimate(flops=2 * B_pad * V_pad * H_pad,
                           transcendentals=0,
                           bytes_accessed=int(bytes_accessed))

    out = pl.pallas_call(
        kernel,
        out_shape=jax.ShapeDtypeStruct((B_pad, H_pad), jnp.float32),
        grid=grid,
        in_specs=in_specs,
        out_specs=out_specs,
        compiler_params=pltpu.CompilerParams(
            dimension_semantics=dims,
            vmem_limit_bytes=vmem_limit,
        ),
        cost_estimate=cost,
    )(x_p, beta_p, ksi_p)

    return out[:B, :H]


# ----------------------------------------------------------------------------
# Deterministic parameter construction (mirrors SpatialSTGPInputLayer.__init__)
# ----------------------------------------------------------------------------
def sample_inverse_gamma(key, a, b):
    # X ~ Gamma(a, rate=b)  =>  1/X ~ InvGamma(a, b)
    g = jax.random.gamma(key, a) / b
    return 1.0 / g


def build_params(key, num_units, grids, poly_degree=4, a_lambda=2.0, b_lambda=1.0,
                 a_theta=2.0, b_theta=1.0):
    """Returns (beta (H,V), ksi (H,)) built like the module's __init__."""
    k_lam, k_cu, k_theta, k_ksi = jax.random.split(key, 4)
    V = grids.shape[0]

    # sigma_lambda_squared ~ InvGamma(a_lambda, b_lambda)
    sigma_lambda_sq = sample_inverse_gamma(k_lam, a_lambda, b_lambda)

    # --- GP eigen decomposition (2-D tensor-product cosine stand-in) ---------
    lam_1d = jnp.exp(-0.5 * jnp.arange(poly_degree, dtype=jnp.float32))
    eigenvalues = (lam_1d[:, None] * lam_1d[None, :]).reshape(-1)       # (K,)
    K = eigenvalues.shape[0]

    gx = grids[:, 0][:, None]                                           # (V,1)
    gy = grids[:, 1][:, None]
    freqs = jnp.arange(poly_degree, dtype=jnp.float32)[None, :]         # (1,P)
    phi_x = jnp.cos(math.pi * gx * (freqs + 1.0))                       # (V,P)
    phi_y = jnp.cos(math.pi * gy * (freqs + 1.0))                       # (V,P)
    eigenfuncs = (phi_x[:, :, None] * phi_y[:, None, :]).reshape(V, K)  # (V,K)
    eigenfuncs = eigenfuncs / (jnp.linalg.norm(eigenfuncs, axis=0, keepdims=True) + 1e-8)

    # Cu ~ N(0, sigma_lambda^2 * Lambda)  -> (H, K)
    std_dev = jnp.sqrt(sigma_lambda_sq * eigenvalues)                   # (K,)
    Cu = jax.random.normal(k_cu, (num_units, K), dtype=jnp.float32) * std_dev

    # beta = Cu @ eigenfuncs.T  -> (H, V)
    beta = Cu @ eigenfuncs.T

    # ksi ~ Normal(0, sigma_theta),  sigma_theta^2 ~ InvGamma(a_theta, b_theta)
    sigma_theta_sq = sample_inverse_gamma(k_theta, a_theta, b_theta)
    ksi = jax.random.normal(k_ksi, (num_units,), dtype=jnp.float32) * jnp.sqrt(sigma_theta_sq)

    return beta.astype(jnp.float32), ksi.astype(jnp.float32)


# ----------------------------------------------------------------------------
# Pure-JAX reference (same bf16 input rounding, f32 math) for correctness
# ----------------------------------------------------------------------------
def reference_forward_bf16(x, beta, ksi, compute_dtype=jnp.bfloat16):
    x_c = jnp.asarray(x).astype(compute_dtype).astype(jnp.float32)
    b_c = jnp.asarray(beta).astype(compute_dtype).astype(jnp.float32)
    z = jnp.matmul(x_c, b_c.T, precision=lax.Precision.HIGHEST) + ksi
    return jax.nn.relu(z)


if __name__ == "__main__":
    key = jax.random.PRNGKey(0)
    k_grid, k_x, k_param = jax.random.split(key, 3)

    # Small shapes: 16x16 spatial grid -> V = 256 voxels, batch = 2, H = 32.
    side = 16
    V = side * side
    batch = 2
    num_units = 32

    # Grid of 2-D coordinates in [0, 1]^2 (the "skeleton" of the image).
    lin = jnp.linspace(0.0, 1.0, side, dtype=jnp.float32)
    gx, gy = jnp.meshgrid(lin, lin, indexing="ij")
    grids = jnp.stack([gx.reshape(-1), gy.reshape(-1)], axis=-1)        # (V, 2)

    beta, ksi = build_params(k_param, num_units, grids, poly_degree=4)

    # One-time padding / bf16 cast of the parameters (hoisted out of forward).
    beta_p, ksi_p, meta = prepare_params(beta, ksi)

    # Input image intensities, flattened to (batch, V).
    x = jax.random.normal(k_x, (batch, V), dtype=jnp.float32)

    out = stgp_input_forward(x, beta_p, ksi_p, meta)
    out = jax.block_until_ready(out)

    ref = reference_forward_bf16(x, beta, ksi)
    assert out.shape == (batch, num_units)
    assert jnp.allclose(out, ref, atol=1e-3, rtol=1e-3), "mismatch vs reference"

    print("KERNEL_OK")
</pallas_src>

<mosaic_0001>
module attributes {stable_mosaic.version = 11 : i64} {
  func.func @_stgp_flat_kernel(%arg0: i32, %arg1: memref<16x256xbf16, #tpu.memory_space<vmem>>, %arg2: memref<128x256xbf16, #tpu.memory_space<vmem>>, %arg3: memref<1x128xf32, #tpu.memory_space<vmem>>, %arg4: memref<16x128xf32, #tpu.memory_space<vmem>>) attributes {dimension_semantics = [#tpu.dimension_semantics<parallel>], iteration_bounds = array<i64: 1>, scalar_prefetch = 0 : i64, scratch_operands = 0 : i64, tpu.core_type = #tpu.core_type<tc>, window_params = [{pipeline_mode = #tpu.pipeline_mode<synchronous>, transform_indices = @transform_0, window_bounds = array<i64: 16, 256>}, {transform_indices = @transform_1, window_bounds = array<i64: 128, 256>}, {transform_indices = @transform_2, window_bounds = array<i64: 1, 128>}, {transform_indices = @transform_3, window_bounds = array<i64: 16, 128>}]} {
    %c0 = arith.constant 0 : index
    %c0_0 = arith.constant 0 : index
    %0 = vector.load %arg1[%c0, %c0_0] : memref<16x256xbf16, #tpu.memory_space<vmem>>, vector<16x256xbf16>
    %c0_1 = arith.constant 0 : index
    %c0_2 = arith.constant 0 : index
    %1 = vector.load %arg2[%c0_1, %c0_2] : memref<128x256xbf16, #tpu.memory_space<vmem>>, vector<128x256xbf16>
    %cst = arith.constant dense<0.000000e+00> : vector<16x128xf32>
    %2 = tpu.matmul %0, %1, %cst {dimension_numbers = #tpu.dot_dimension_numbers<[1], [1], [0], [0], [0, 0, 1, 0], [], []>} : vector<16x256xbf16>, vector<128x256xbf16>, vector<16x128xf32> -> vector<16x128xf32>
    %c0_3 = arith.constant 0 : index
    %c0_4 = arith.constant 0 : index
    %3 = vector.load %arg3[%c0_3, %c0_4] : memref<1x128xf32, #tpu.memory_space<vmem>>, vector<1x128xf32>
    %4 = vector.broadcast %3 : vector<1x128xf32> to vector<16x128xf32>
    %5 = arith.addf %2, %4 : vector<16x128xf32>
    %cst_5 = arith.constant 0.000000e+00 : f32
    %6 = vector.broadcast %cst_5 : f32 to vector<16x128xf32>
    %7 = arith.maximumf %5, %6 : vector<16x128xf32>
    %c0_6 = arith.constant 0 : index
    %c0_7 = arith.constant 0 : index
    %8 = vector.load %arg4[%c0_6, %c0_7] : memref<16x128xf32, #tpu.memory_space<vmem>>, vector<16x128xf32>
    tpu.vector_store %arg4[%c0_6, %c0_7], %7 {strides = array<i32>} : memref<16x128xf32, #tpu.memory_space<vmem>>, vector<16x128xf32>,
    return
  }
  func.func @transform_0(%arg0: i32) -> (i32, i32) {
    %c0_i32 = arith.constant 0 : i32
    %c0_i32_0 = arith.constant 0 : i32
    %c0_i32_1 = arith.constant 0 : i32
    return %c0_i32, %c0_i32_0 : i32, i32
  }
  func.func @transform_1(%arg0: i32) -> (i32, i32) {
    %c0_i32 = arith.constant 0 : i32
    %c0_i32_0 = arith.constant 0 : i32
    return %arg0, %c0_i32 : i32, i32
  }
  func.func @transform_2(%arg0: i32) -> (i32, i32) {
    %c0_i32 = arith.constant 0 : i32
    %c0_i32_0 = arith.constant 0 : i32
    return %c0_i32, %arg0 : i32, i32
  }
  func.func @transform_3(%arg0: i32) -> (i32, i32) {
    %c0_i32 = arith.constant 0 : i32
    %c0_i32_0 = arith.constant 0 : i32
    return %c0_i32, %arg0 : i32, i32
  }
}

</mosaic_0001>

<llo_original>
// kernel: tpu_custom_call.1
$region0: #{tpu_custom_call.1}
  #allocation0 [shape = 'u32[]', space=smem, size = 0x4, offset = 0x4, fixed_abs, tag = 'smem constant byte address 0x4 - core index']
  #allocation1 [shape = 'u32[72,128]{1,0:T(1,128)}', space=vmem, size = 0x9000, scoped, tag = 'internal scratch']
  %s0 = inlined_call_operand.hbm [shape: bf16[16,256], index: 0, kind: input, shape index: {}]
  %s1 = inlined_call_operand.hbm [shape: bf16[128,256], index: 1, kind: input, shape index: {}]
  %s2 = inlined_call_operand.vmem [shape: f32[1,128], index: 2, kind: input, shape index: {}]
  %s3 = inlined_call_operand.hbm [shape: f32[16,128], index: 3, kind: output, shape index: {}]
  %s4 = sld [smem:[#allocation0]]
  $region30: #{tpu_custom_call.1} parent=0
    _
  %s6 = ssub.s32 1, %s4
  %s7 = scalar_select 0, %s6, %s4
  $region1: #{tpu_custom_call.1} parent=0
    #allocation2 [shape = 'u8[8192]{0}', space=vmem, size = 0x2000, scoped, tag = 'input window, operand 0, single buffered']
    #allocation3 [shape = 's32[1]{0}', space=sflag, size = 0x4, scoped, tag = 'scoped memory for tpu_custom_call.1']
    #allocation4 [shape = 's32[1]{0}', space=sflag, size = 0x4, scoped, tag = 'scoped memory for tpu_custom_call.1']
    #allocation5 [shape = 'u8[65536]{0}', space=vmem, size = 0x10000, scoped, tag = 'input window, operand 1, single buffered']
    #allocation6 [shape = 's32[1]{0}', space=sflag, size = 0x4, scoped, tag = 'scoped memory for tpu_custom_call.1']
    #allocation7 [shape = 'u8[8192]{0}', space=vmem, size = 0x2000, scoped, tag = 'output window, operand 0, single buffered']
    %8 = vsyncpa [#allocation3], 0
    %9 = vsyncpa [#allocation6], 0
    %10 = vsyncpa [#allocation4], 0
    // Predicated region
    $region2: #{tpu_custom_call.1} parent=1 // pred_check
      _
    $region3: #{tpu_custom_call.1} parent=1 // pred_check_branch
      %12 = sbr.rel (0) target = $region5
    $region4: #{tpu_custom_call.1} parent=1 // pred_region
      %14 = vsyncadd [#allocation3], 0
      %s15 = sshll.u32 %s0, 4
      %s16 = int_to_ptr.hbm [resolvable:$true] %s15
      %s17 = sshll.u32 [#allocation2], 4
      %s18 = int_to_ptr.vmem [resolvable:$true] %s17
      %23 = dma.hbm_to_vmem [thread:$0]  %s16, 256, %s18, [#allocation3], 128, 128, 8
    $region5: #{tpu_custom_call.1} parent=1 // pred_fallthru
      _
    // Predicated region
    $region6: #{tpu_custom_call.1} parent=1 // pred_check
      _
    $region7: #{tpu_custom_call.1} parent=1 // pred_check_branch
      %25 = sbr.rel (0) target = $region9
    $region8: #{tpu_custom_call.1} parent=1 // pred_region
      %27 = vsyncadd [#allocation6], 0
      %s28 = sshll.u32 %s1, 4
      %s29 = int_to_ptr.hbm [resolvable:$true] %s28
      %s30 = sshll.u32 [#allocation5], 4
      %s31 = int_to_ptr.vmem [resolvable:$true] %s30
      %36 = dma.hbm_to_vmem [thread:$0]  %s29, 2048, %s31, [#allocation6], 128, 128, 8
    $region9: #{tpu_custom_call.1} parent=1 // pred_fallthru
      _
    // Predicated region
    $region10: #{tpu_custom_call.1} parent=1 // pred_check
      _
    $region11: #{tpu_custom_call.1} parent=1 // pred_check_branch
      %38 = sbr.rel (0) target = $region13
    $region12: #{tpu_custom_call.1} parent=1 // pred_region
      _
    $region13: #{tpu_custom_call.1} parent=1 // pred_fallthru
      _
    // Predicated region
    $region14: #{tpu_custom_call.1} parent=1 // pred_check
      _
    $region15: #{tpu_custom_call.1} parent=1 // pred_check_branch
      %40 = sbr.rel (0) target = $region17
    $region16: #{tpu_custom_call.1} parent=1 // pred_region
      %42 = dma.done [#allocation3], 256
    $region17: #{tpu_custom_call.1} parent=1 // pred_fallthru
      _
    // Predicated region
    $region18: #{tpu_custom_call.1} parent=1 // pred_check
      _
    $region19: #{tpu_custom_call.1} parent=1 // pred_check_branch
      %44 = sbr.rel (0) target = $region21
    $region20: #{tpu_custom_call.1} parent=1 // pred_region
      %46 = dma.done [#allocation6], 2048
    $region21: #{tpu_custom_call.1} parent=1 // pred_fallthru
      _
    %v47 = vld [vmem:[#allocation2] sm:$0xff]
    %v48 = vld [vmem:[#allocation2 + $0x8] sm:$0xff]
    %v49 = vld [vmem:[#allocation5] sm:$0xff]
    %v50 = vld [vmem:[#allocation5 + $0x8] sm:$0xff]
    %v51 = vld [vmem:[#allocation5 + $0x10] sm:$0xff]
    %v52 = vld [vmem:[#allocation5 + $0x18] sm:$0xff]
    %v53 = vld [vmem:[#allocation5 + $0x20] sm:$0xff]
    %v54 = vld [vmem:[#allocation5 + $0x28] sm:$0xff]
    %v55 = vld [vmem:[#allocation5 + $0x30] sm:$0xff]
    %v56 = vld [vmem:[#allocation5 + $0x38] sm:$0xff]
    %v57 = vld [vmem:[#allocation5 + $0x40] sm:$0xff]
    %v58 = vld [vmem:[#allocation5 + $0x48] sm:$0xff]
    %v59 = vld [vmem:[#allocation5 + $0x50] sm:$0xff]
    %v60 = vld [vmem:[#allocation5 + $0x58] sm:$0xff]
    %v61 = vld [vmem:[#allocation5 + $0x60] sm:$0xff]
    %v62 = vld [vmem:[#allocation5 + $0x68] sm:$0xff]
    %v63 = vld [vmem:[#allocation5 + $0x70] sm:$0xff]
    %v64 = vld [vmem:[#allocation5 + $0x78] sm:$0xff]
    %v65 = vld [vmem:[%s2] sm:$0x1]
    %v67 = vperm.slane %v65, 0
    %v71 = vunpack.c.l.b16 %v47
    %v72 = vunpack.c.h.b16 %v47
    %v73 = vunpack.c.l.b16 %v48
    %v74 = vunpack.c.h.b16 %v48
    %v75 = vpack.c.b16 %v73, %v71
    %v76 = vpack.c.b16 %v74, %v72
    %v95 = vunpack.c.l.b16 %v49
    %v96 = vunpack.c.h.b16 %v49
    %v97 = vunpack.c.l.b16 %v50
    %v98 = vunpack.c.h.b16 %v50
    %v99 = vunpack.c.l.b16 %v51
    %v100 = vunpack.c.h.b16 %v51
    %v101 = vunpack.c.l.b16 %v52
    %v102 = vunpack.c.h.b16 %v52
    %v103 = vunpack.c.l.b16 %v53
    %v104 = vunpack.c.h.b16 %v53
    %v105 = vunpack.c.l.b16 %v54
    %v106 = vunpack.c.h.b16 %v54
    %v107 = vunpack.c.l.b16 %v55
    %v108 = vunpack.c.h.b16 %v55
    %v109 = vunpack.c.l.b16 %v56
    %v110 = vunpack.c.h.b16 %v56
    %v111 = vunpack.c.l.b16 %v57
    %v112 = vunpack.c.h.b16 %v57
    %v113 = vunpack.c.l.b16 %v58
    %v114 = vunpack.c.h.b16 %v58
    %v115 = vunpack.c.l.b16 %v59
    %v116 = vunpack.c.h.b16 %v59
    %v117 = vunpack.c.l.b16 %v60
    %v118 = vunpack.c.h.b16 %v60
    %v119 = vunpack.c.l.b16 %v61
    %v120 = vunpack.c.h.b16 %v61
    %v121 = vunpack.c.l.b16 %v62
    %v122 = vunpack.c.h.b16 %v62
    %v123 = vunpack.c.l.b16 %v63
    %v124 = vunpack.c.h.b16 %v63
    %v125 = vunpack.c.l.b16 %v64
    %v126 = vunpack.c.h.b16 %v64
    %v127 = vpack.c.b16 %v97, %v95
    %v128 = vpack.c.b16 %v98, %v96
    %v129 = vpack.c.b16 %v101, %v99
    %v130 = vpack.c.b16 %v102, %v100
    %v131 = vpack.c.b16 %v105, %v103
    %v132 = vpack.c.b16 %v106, %v104
    %v133 = vpack.c.b16 %v109, %v107
    %v134 = vpack.c.b16 %v110, %v108
    %v135 = vpack.c.b16 %v113, %v111
    %v136 = vpack.c.b16 %v114, %v112
    %v137 = vpack.c.b16 %v117, %v115
    %v138 = vpack.c.b16 %v118, %v116
    %v139 = vpack.c.b16 %v121, %v119
    %v140 = vpack.c.b16 %v122, %v120
    %v141 = vpack.c.b16 %v125, %v123
    %v142 = vpack.c.b16 %v126, %v124
    %159 = vmatpush.bf16.xpose.msra.mxu0 %v141
    %160 = vmatpush.bf16.xpose.msra.mxu0 %v139
    %161 = vmatpush.bf16.xpose.msra.mxu0 %v137
    %162 = vmatpush.bf16.xpose.msra.mxu0 %v135
    %163 = vmatpush.bf16.xpose.msra.mxu0 %v133
    %164 = vmatpush.bf16.xpose.msra.mxu0 %v131
    %165 = vmatpush.bf16.xpose.msra.mxu0 %v129
    %166 = vmatpush.bf16.xpose.msra.mxu0 %v127
    %167 = vmatmul.bf16.gmra.mxu0 %v75
    %v168 = vpop.f32.mrf.mxu0
    %v169 = vadd.f32 %v67, %v168
    %v170 = vpop.f32.mrf.mxu0
    %v171 = vadd.f32 %v67, %v170
    %172 = vdwg.mxu0
    %173 = vmatpush.bf16.xpose.msra.mxu0 %v142
    %174 = vmatpush.bf16.xpose.msra.mxu0 %v140
    %175 = vmatpush.bf16.xpose.msra.mxu0 %v138
    %176 = vmatpush.bf16.xpose.msra.mxu0 %v136
    %177 = vmatpush.bf16.xpose.msra.mxu0 %v134
    %178 = vmatpush.bf16.xpose.msra.mxu0 %v132
    %179 = vmatpush.bf16.xpose.msra.mxu0 %v130
    %180 = vmatpush.bf16.xpose.msra.mxu0 %v128
    %181 = vmatmul.bf16.gmra.mxu0 %v76
    %v182 = vpop.f32.mrf.mxu0
    %v183 = vadd.f32 %v169, %v182
    %v184 = vpop.f32.mrf.mxu0
    %v185 = vadd.f32 %v171, %v184
    %186 = vdwg.mxu0
    %v187 = vmax.f32 %v183, 0.0
    %v188 = vmax.f32 %v185, 0.0
    %189 = vst [vmem:[#allocation7] sm:$0xff] %v187
    %190 = vst [vmem:[#allocation7 + $0x8] sm:$0xff] %v188
    // Predicated region
    $region22: #{tpu_custom_call.1} parent=1 // pred_check
      _
    $region23: #{tpu_custom_call.1} parent=1 // pred_check_branch
      %192 = sbr.rel (0) target = $region25
    $region24: #{tpu_custom_call.1} parent=1 // pred_region
      %194 = vsyncadd [#allocation4], 0
      %s195 = sshll.u32 [#allocation7], 4
      %s196 = int_to_ptr.vmem [resolvable:$true] %s195
      %s197 = sshll.u32 %s3, 4
      %s198 = int_to_ptr.hbm [resolvable:$true] %s197
      %203 = dma.vmem_to_hbm [thread:$0]  %s196, 256, %s198, [#allocation4], 128, 128, 8
    $region25: #{tpu_custom_call.1} parent=1 // pred_fallthru
      _
    // Predicated region
    $region26: #{tpu_custom_call.1} parent=1 // pred_check
      _
    $region27: #{tpu_custom_call.1} parent=1 // pred_check_branch
      %205 = sbr.rel (0) target = $region29
    $region28: #{tpu_custom_call.1} parent=1 // pred_region
      %207 = dma.done [#allocation4], 256
    $region29: #{tpu_custom_call.1} parent=1 // pred_fallthru
      _
    %208 = vsyncpa [#allocation3], 1
    %209 = vsyncpa [#allocation6], 1
    %210 = vsyncpa [#allocation4], 1

</llo_original>
